<compile_context>
chip_gen: v6e
topology: v6e:2x2x1
jax: 0.10.0
libtpu: 0.0.40
codegen_flags: <defaults>
</compile_context>

<pallas_src>
import functools

import jax
import jax.numpy as jnp
from jax.experimental import pallas as pl
from jax.experimental.pallas import tpu as pltpu


def _round_up(v, m):
    return (v + m - 1) // m * m


def _pick_tiles(batch, n_points, target_rows=512):
    """Choose (TB, TN, N_pad): TB*TN ~ target_rows, TN sublane-tile aligned."""
    n_aligned = _round_up(n_points, 16)        # bf16 sublane tile = 16 rows
    tn = n_aligned if n_aligned <= target_rows else target_rows
    n_pad = _round_up(n_points, tn)
    want = max(1, target_rows // tn)
    tb = 1
    for d in range(1, batch + 1):              # largest divisor of B <= want
        if batch % d == 0 and d <= want:
            tb = d
    return tb, tn, n_pad


def _point_mlp_max_kernel(x_ref, w1_ref, b1_ref, w2_ref, b2_ref, w3_ref,
                          b3_ref, g_ref, *, n_actual, n_padded):
    """Shared point-wise MLP (3 x Conv1d(k=1)+BN+ReLU) + running max over points."""
    ni = pl.program_id(1)                      # N-tile (reduction) step

    @pl.when(ni == 0)
    def _init():
        g_ref[...] = jnp.full(g_ref.shape, -jnp.inf, dtype=g_ref.dtype)

    tb, tn, c = x_ref.shape
    x = x_ref[...].reshape(tb * tn, c)                          # (rows, C) bf16

    h = jnp.dot(x, w1_ref[...], preferred_element_type=jnp.float32) + b1_ref[...]
    h = jnp.maximum(h, 0.0)                                     # (rows, 64) f32
    h = jnp.dot(h.astype(w2_ref.dtype), w2_ref[...],
                preferred_element_type=jnp.float32) + b2_ref[...]
    h = jnp.maximum(h, 0.0)                                     # (rows, 128)
    h = jnp.dot(h.astype(w3_ref.dtype), w3_ref[...],
                preferred_element_type=jnp.float32) + b3_ref[...]
    h = jnp.maximum(h, 0.0)                                     # (rows, 1024)

    feat = h.shape[-1]
    h = h.reshape(tb, tn, feat)

    if n_padded != n_actual:                   # static: only traced if padding exists
        row = jax.lax.broadcasted_iota(jnp.int32, (tn, feat), 0) + ni * tn
        h = jnp.where((row < n_actual)[None, :, :], h, -jnp.inf)

    part = jnp.max(h, axis=1, keepdims=True)                    # (TB, 1, 1024)
    g_ref[...] = jnp.maximum(g_ref[...], part)                  # running max


def _head_kernel(g_ref, w4_ref, b4_ref, w5_ref, b5_ref, w6_ref, b6_ref, out_ref):
    """Batched FC head: Linear+BN+ReLU x2, then final Linear (+identity folded in b6)."""
    f = jnp.dot(g_ref[...].astype(w4_ref.dtype), w4_ref[...],
                preferred_element_type=jnp.float32) + b4_ref[...]
    f = jnp.maximum(f, 0.0)                                     # (B, 512)
    f = jnp.dot(f.astype(w5_ref.dtype), w5_ref[...],
                preferred_element_type=jnp.float32) + b5_ref[...]
    f = jnp.maximum(f, 0.0)                                     # (B, 256)
    out_ref[...] = jnp.dot(f.astype(w6_ref.dtype), w6_ref[...],
                           preferred_element_type=jnp.float32) + b6_ref[...]


def transform_net(x_ncw, params):
    """x_ncw: (B, C_in, N) float32, same layout as the PyTorch module input."""
    w1, b1, w2, b2, w3, b3, w4, b4, w5, b5, w6p, b6p = params
    B, C, N = x_ncw.shape
    K = C
    feat = w3.shape[1]                  # 1024
    out_cols = w6p.shape[1]             # round_up(K*K, 128)

    x = jnp.transpose(x_ncw, (0, 2, 1)).astype(jnp.bfloat16)    # (B, N, C)
    tb, tn, n_pad = _pick_tiles(B, N)
    if n_pad != N:
        x = jnp.pad(x, ((0, 0), (0, n_pad - N), (0, 0)))        # masked in kernel

    def const(a):
        return pl.BlockSpec(a.shape, lambda *_: (0,) * a.ndim)

    # ---- kernel 1: point-wise MLP + max over points -> g (B, 1, 1024) ----
    g3 = pl.pallas_call(
        functools.partial(_point_mlp_max_kernel, n_actual=N, n_padded=n_pad),
        out_shape=jax.ShapeDtypeStruct((B, 1, feat), jnp.float32),
        grid=(B // tb, n_pad // tn),
        in_specs=[pl.BlockSpec((tb, tn, C), lambda bi, ni: (bi, ni, 0)),
                  const(w1), const(b1), const(w2), const(b2),
                  const(w3), const(b3)],
        out_specs=pl.BlockSpec((tb, 1, feat), lambda bi, ni: (bi, 0, 0)),
        compiler_params=pltpu.CompilerParams(
            dimension_semantics=("parallel", "arbitrary"),
            vmem_limit_bytes=32 * 1024 * 1024),
    )(x, w1, b1, w2, b2, w3, b3)

    g = g3.reshape(B, feat)                                     # (B, 1024)

    # ---- kernel 2: batched FC head (one matmul per layer over all B rows) ----
    out_pad = pl.pallas_call(
        _head_kernel,
        out_shape=jax.ShapeDtypeStruct((B, out_cols), jnp.float32),
        grid=(1,),
        in_specs=[const(g), const(w4), const(b4), const(w5), const(b5),
                  const(w6p), const(b6p)],
        out_specs=pl.BlockSpec((B, out_cols), lambda i: (0, 0)),
        compiler_params=pltpu.CompilerParams(
            dimension_semantics=("arbitrary",)),
    )(g, w4, b4, w5, b5, w6p, b6p)

    return out_pad[:, :K * K].reshape(B, K, K)


def init_params(key, input_channel):
    """Deterministic synthetic params; BN (eval mode) folded into (W, b).

    Weights are stored in bf16 (MXU-native); biases stay f32.  The identity
    matrix is folded into the final bias, and the final layer is padded to a
    128-lane-dense output width.
    """
    K = input_channel
    eps = 1e-5
    dims_bn = [(K, 64), (64, 128), (128, 1024), (1024, 512), (512, 256)]
    folded = []
    for cin, cout in dims_bn:
        key, kw, kb, kg, kbe, km, kv = jax.random.split(key, 7)
        W = jax.random.normal(kw, (cin, cout), jnp.float32) * 0.05
        b = jax.random.normal(kb, (cout,), jnp.float32) * 0.05
        gamma = 1.0 + 0.1 * jax.random.normal(kg, (cout,), jnp.float32)
        beta = 0.1 * jax.random.normal(kbe, (cout,), jnp.float32)
        mean = 0.1 * jax.random.normal(km, (cout,), jnp.float32)
        var = jnp.abs(jax.random.normal(kv, (cout,), jnp.float32)) + 0.5
        scale = gamma / jnp.sqrt(var + eps)
        folded.append((W * scale[None, :]).astype(jnp.bfloat16))
        folded.append(((b - mean) * scale + beta).reshape(1, cout))

    key, kw, kb = jax.random.split(key, 3)
    W6 = jax.random.normal(kw, (256, K * K), jnp.float32) * 0.05
    b6 = jax.random.normal(kb, (K * K,), jnp.float32) * 0.05
    b6 = b6 + jnp.eye(K, dtype=jnp.float32).reshape(K * K)      # fold identity add
    cols = _round_up(K * K, 128)                                # lane-dense output
    W6p = jnp.zeros((256, cols), jnp.float32).at[:, :K * K].set(W6)
    b6p = jnp.zeros((1, cols), jnp.float32).at[0, :K * K].set(b6)
    folded += [W6p.astype(jnp.bfloat16), b6p]
    return tuple(folded)


def reference(x_ncw, params):
    """Pure-JAX reference of the same (BN-folded, bf16-weight) forward pass."""
    w1, b1, w2, b2, w3, b3, w4, b4, w5, b5, w6p, b6p = params
    B, C, N = x_ncw.shape
    f32 = jnp.float32
    x = jnp.transpose(x_ncw, (0, 2, 1)).astype(jnp.bfloat16).reshape(B * N, C)
    h = jax.nn.relu(jnp.dot(x, w1, preferred_element_type=f32) + b1)
    h = jax.nn.relu(jnp.dot(h.astype(w2.dtype), w2, preferred_element_type=f32) + b2)
    h = jax.nn.relu(jnp.dot(h.astype(w3.dtype), w3, preferred_element_type=f32) + b3)
    g = jnp.max(h.reshape(B, N, -1), axis=1)                    # (B, 1024)
    f = jax.nn.relu(jnp.dot(g.astype(w4.dtype), w4, preferred_element_type=f32) + b4)
    f = jax.nn.relu(jnp.dot(f.astype(w5.dtype), w5, preferred_element_type=f32) + b5)
    o = jnp.dot(f.astype(w6p.dtype), w6p, preferred_element_type=f32) + b6p
    return o[:, :C * C].reshape(B, C, C)


if __name__ == "__main__":
    key = jax.random.PRNGKey(0)
    C_in = 3
    k_params, k_x1, k_x2 = jax.random.split(key, 3)
    params = init_params(k_params, C_in)

    # Case 1: tiny point cloud (single grid step, whole cloud per step).
    B1, N1 = 2, 16
    x1 = jax.random.normal(k_x1, (B1, C_in, N1), jnp.float32)   # PyTorch (B, C, N)
    out1 = jax.block_until_ready(transform_net(x1, params))
    ref1 = reference(x1, params)
    assert out1.shape == (B1, C_in, C_in)
    assert jnp.allclose(out1, ref1, rtol=1e-3, atol=1e-3), "case1 mismatch vs reference"

    # Case 2: larger N -> exercises the tiled-N running-max accumulator and the
    # -inf masking of padded point rows (N=600 pads to 1024 with TN=512 tiles).
    B2, N2 = 2, 600
    x2 = jax.random.normal(k_x2, (B2, C_in, N2), jnp.float32)
    out2 = jax.block_until_ready(transform_net(x2, params))
    ref2 = reference(x2, params)
    assert out2.shape == (B2, C_in, C_in)
    assert jnp.allclose(out2, ref2, rtol=1e-3, atol=1e-3), "case2 mismatch vs reference"

    print("KERNEL_OK")
</pallas_src>

<mosaic_0001>
module attributes {stable_mosaic.version = 11 : i64} {
  func.func @_point_mlp_max_kernel(%arg0: i32, %arg1: i32, %arg2: memref<2x16x3xbf16, #tpu.memory_space<vmem>>, %arg3: memref<3x64xbf16, #tpu.memory_space<vmem>>, %arg4: memref<1x64xf32, #tpu.memory_space<vmem>>, %arg5: memref<64x128xbf16, #tpu.memory_space<vmem>>, %arg6: memref<1x128xf32, #tpu.memory_space<vmem>>, %arg7: memref<128x1024xbf16, #tpu.memory_space<vmem>>, %arg8: memref<1x1024xf32, #tpu.memory_space<vmem>>, %arg9: memref<2x1x1024xf32, #tpu.memory_space<vmem>>) attributes {dimension_semantics = [#tpu.dimension_semantics<parallel>, #tpu.dimension_semantics<arbitrary>], iteration_bounds = array<i64: 1, 1>, scalar_prefetch = 0 : i64, scratch_operands = 0 : i64, tpu.core_type = #tpu.core_type<tc>, window_params = [{transform_indices = @transform_0, window_bounds = array<i64: 2, 16, 3>}, {pipeline_mode = #tpu.pipeline_mode<synchronous>, transform_indices = @transform_1, window_bounds = array<i64: 3, 64>}, {pipeline_mode = #tpu.pipeline_mode<synchronous>, transform_indices = @transform_2, window_bounds = array<i64: 1, 64>}, {pipeline_mode = #tpu.pipeline_mode<synchronous>, transform_indices = @transform_3, window_bounds = array<i64: 64, 128>}, {pipeline_mode = #tpu.pipeline_mode<synchronous>, transform_indices = @transform_4, window_bounds = array<i64: 1, 128>}, {pipeline_mode = #tpu.pipeline_mode<synchronous>, transform_indices = @transform_5, window_bounds = array<i64: 128, 1024>}, {pipeline_mode = #tpu.pipeline_mode<synchronous>, transform_indices = @transform_6, window_bounds = array<i64: 1, 1024>}, {transform_indices = @transform_7, window_bounds = array<i64: 2, 1, 1024>}]} {
    %c0_i32 = arith.constant 0 : i32
    %0 = arith.cmpi eq, %arg1, %c0_i32 : i32
    %1 = arith.extui %0 : i1 to i32
    %c0_i32_0 = arith.constant 0 : i32
    %2 = arith.cmpi ne, %1, %c0_i32_0 : i32
    scf.if %2 {
      %cst_27 = arith.constant 0xFF800000 : f32
      %34 = vector.broadcast %cst_27 : f32 to vector<2x1x1024xf32>
      %c0_28 = arith.constant 0 : index
      %c0_29 = arith.constant 0 : index
      %c0_30 = arith.constant 0 : index
      %35 = vector.load %arg9[%c0_28, %c0_29, %c0_30] : memref<2x1x1024xf32, #tpu.memory_space<vmem>>, vector<2x1x1024xf32>
      tpu.vector_store %arg9[%c0_28, %c0_29, %c0_30], %34 {strides = array<i32>} : memref<2x1x1024xf32, #tpu.memory_space<vmem>>, vector<2x1x1024xf32>,
    } else {
    }
    %c0 = arith.constant 0 : index
    %c0_1 = arith.constant 0 : index
    %c0_2 = arith.constant 0 : index
    %3 = vector.load %arg2[%c0, %c0_1, %c0_2] : memref<2x16x3xbf16, #tpu.memory_space<vmem>>, vector<2x16x3xbf16>
    %4 = vector.shape_cast %3 : vector<2x16x3xbf16> to vector<32x3xbf16>
    %c0_3 = arith.constant 0 : index
    %c0_4 = arith.constant 0 : index
    %5 = vector.load %arg3[%c0_3, %c0_4] : memref<3x64xbf16, #tpu.memory_space<vmem>>, vector<3x64xbf16>
    %cst = arith.constant dense<0.000000e+00> : vector<32x64xf32>
    %6 = tpu.matmul %4, %5, %cst {dimension_numbers = #tpu.dot_dimension_numbers<[1], [0], [0], [1], [0, 0, 1, 1], [], []>} : vector<32x3xbf16>, vector<3x64xbf16>, vector<32x64xf32> -> vector<32x64xf32>
    %c0_5 = arith.constant 0 : index
    %c0_6 = arith.constant 0 : index
    %7 = vector.load %arg4[%c0_5, %c0_6] : memref<1x64xf32, #tpu.memory_space<vmem>>, vector<1x64xf32>
    %8 = vector.broadcast %7 : vector<1x64xf32> to vector<32x64xf32>
    %9 = arith.addf %6, %8 : vector<32x64xf32>
    %cst_7 = arith.constant 0.000000e+00 : f32
    %10 = vector.broadcast %cst_7 : f32 to vector<32x64xf32>
    %11 = arith.maximumf %9, %10 : vector<32x64xf32>
    %12 = arith.truncf %11 : vector<32x64xf32> to vector<32x64xbf16>
    %c0_8 = arith.constant 0 : index
    %c0_9 = arith.constant 0 : index
    %13 = vector.load %arg5[%c0_8, %c0_9] : memref<64x128xbf16, #tpu.memory_space<vmem>>, vector<64x128xbf16>
    %cst_10 = arith.constant dense<0.000000e+00> : vector<32x128xf32>
    %14 = tpu.matmul %12, %13, %cst_10 {dimension_numbers = #tpu.dot_dimension_numbers<[1], [0], [0], [1], [0, 0, 1, 1], [], []>} : vector<32x64xbf16>, vector<64x128xbf16>, vector<32x128xf32> -> vector<32x128xf32>
    %c0_11 = arith.constant 0 : index
    %c0_12 = arith.constant 0 : index
    %15 = vector.load %arg6[%c0_11, %c0_12] : memref<1x128xf32, #tpu.memory_space<vmem>>, vector<1x128xf32>
    %16 = vector.broadcast %15 : vector<1x128xf32> to vector<32x128xf32>
    %17 = arith.addf %14, %16 : vector<32x128xf32>
    %cst_13 = arith.constant 0.000000e+00 : f32
    %18 = vector.broadcast %cst_13 : f32 to vector<32x128xf32>
    %19 = arith.maximumf %17, %18 : vector<32x128xf32>
    %20 = arith.truncf %19 : vector<32x128xf32> to vector<32x128xbf16>
    %c0_14 = arith.constant 0 : index
    %c0_15 = arith.constant 0 : index
    %21 = vector.load %arg7[%c0_14, %c0_15] : memref<128x1024xbf16, #tpu.memory_space<vmem>>, vector<128x1024xbf16>
    %cst_16 = arith.constant dense<0.000000e+00> : vector<32x1024xf32>
    %22 = tpu.matmul %20, %21, %cst_16 {dimension_numbers = #tpu.dot_dimension_numbers<[1], [0], [0], [1], [0, 0, 1, 1], [], []>} : vector<32x128xbf16>, vector<128x1024xbf16>, vector<32x1024xf32> -> vector<32x1024xf32>
    %c0_17 = arith.constant 0 : index
    %c0_18 = arith.constant 0 : index
    %23 = vector.load %arg8[%c0_17, %c0_18] : memref<1x1024xf32, #tpu.memory_space<vmem>>, vector<1x1024xf32>
    %24 = vector.broadcast %23 : vector<1x1024xf32> to vector<32x1024xf32>
    %25 = arith.addf %22, %24 : vector<32x1024xf32>
    %cst_19 = arith.constant 0.000000e+00 : f32
    %26 = vector.broadcast %cst_19 : f32 to vector<32x1024xf32>
    %27 = arith.maximumf %25, %26 : vector<32x1024xf32>
    %28 = vector.shape_cast %27 : vector<32x1024xf32> to vector<2x16x1024xf32>
    %cst_20 = arith.constant dense<0xFF800000> : vector<2x1024xf32>
    %29 = vector.multi_reduction <maximumf>, %28, %cst_20 [1] : vector<2x16x1024xf32> to vector<2x1024xf32>
    %30 = vector.shape_cast %29 : vector<2x1024xf32> to vector<2x1x1024xf32>
    %c0_21 = arith.constant 0 : index
    %c0_22 = arith.constant 0 : index
    %c0_23 = arith.constant 0 : index
    %31 = vector.load %arg9[%c0_21, %c0_22, %c0_23] : memref<2x1x1024xf32, #tpu.memory_space<vmem>>, vector<2x1x1024xf32>
    %32 = arith.maximumf %31, %30 : vector<2x1x1024xf32>
    %c0_24 = arith.constant 0 : index
    %c0_25 = arith.constant 0 : index
    %c0_26 = arith.constant 0 : index
    %33 = vector.load %arg9[%c0_24, %c0_25, %c0_26] : memref<2x1x1024xf32, #tpu.memory_space<vmem>>, vector<2x1x1024xf32>
    tpu.vector_store %arg9[%c0_24, %c0_25, %c0_26], %32 {strides = array<i32>} : memref<2x1x1024xf32, #tpu.memory_space<vmem>>, vector<2x1x1024xf32>,
    return
  }
  func.func @transform_0(%arg0: i32, %arg1: i32) -> (i32, i32, i32) {
    %c0_i32 = arith.constant 0 : i32
    %c0_i32_0 = arith.constant 0 : i32
    return %arg0, %arg1, %c0_i32 : i32, i32, i32
  }
  func.func @transform_1(%arg0: i32, %arg1: i32) -> (i32, i32) {
    %c0_i32 = arith.constant 0 : i32
    %c0_i32_0 = arith.constant 0 : i32
    %c0_i32_1 = arith.constant 0 : i32
    return %c0_i32, %c0_i32_0 : i32, i32
  }
  func.func @transform_2(%arg0: i32, %arg1: i32) -> (i32, i32) {
    %c0_i32 = arith.constant 0 : i32
    %c0_i32_0 = arith.constant 0 : i32
    %c0_i32_1 = arith.constant 0 : i32
    return %c0_i32, %c0_i32_0 : i32, i32
  }
  func.func @transform_3(%arg0: i32, %arg1: i32) -> (i32, i32) {
    %c0_i32 = arith.constant 0 : i32
    %c0_i32_0 = arith.constant 0 : i32
    %c0_i32_1 = arith.constant 0 : i32
    return %c0_i32, %c0_i32_0 : i32, i32
  }
  func.func @transform_4(%arg0: i32, %arg1: i32) -> (i32, i32) {
    %c0_i32 = arith.constant 0 : i32
    %c0_i32_0 = arith.constant 0 : i32
    %c0_i32_1 = arith.constant 0 : i32
    return %c0_i32, %c0_i32_0 : i32, i32
  }
  func.func @transform_5(%arg0: i32, %arg1: i32) -> (i32, i32) {
    %c0_i32 = arith.constant 0 : i32
    %c0_i32_0 = arith.constant 0 : i32
    %c0_i32_1 = arith.constant 0 : i32
    return %c0_i32, %c0_i32_0 : i32, i32
  }
  func.func @transform_6(%arg0: i32, %arg1: i32) -> (i32, i32) {
    %c0_i32 = arith.constant 0 : i32
    %c0_i32_0 = arith.constant 0 : i32
    %c0_i32_1 = arith.constant 0 : i32
    return %c0_i32, %c0_i32_0 : i32, i32
  }
  func.func @transform_7(%arg0: i32, %arg1: i32) -> (i32, i32, i32) {
    %c0_i32 = arith.constant 0 : i32
    %c0_i32_0 = arith.constant 0 : i32
    %c0_i32_1 = arith.constant 0 : i32
    return %arg0, %c0_i32, %c0_i32_0 : i32, i32, i32
  }
}

</mosaic_0001>

<llo_original>
// kernel: tpu_custom_call.1
$region0: #{tpu_custom_call.1}
  #allocation0 [shape = 'u32[]', space=smem, size = 0x4, offset = 0x4, fixed_abs, tag = 'smem constant byte address 0x4 - core index']
  #allocation1 [shape = 'u32[144,128]{1,0:T(1,128)}', space=vmem, size = 0x12000, scoped, tag = 'internal scratch']
  %s0 = inlined_call_operand.vmem [shape: bf16[2,16,3], index: 0, kind: input, shape index: {}]
  %s1 = inlined_call_operand.vmem [shape: bf16[3,64], index: 1, kind: input, shape index: {}]
  %s2 = inlined_call_operand.vmem [shape: f32[1,64], index: 2, kind: input, shape index: {}]
  %s3 = inlined_call_operand.hbm [shape: bf16[64,128], index: 3, kind: input, shape index: {}]
  %s4 = inlined_call_operand.vmem [shape: f32[1,128], index: 4, kind: input, shape index: {}]
  %s5 = inlined_call_operand.hbm [shape: bf16[128,1024], index: 5, kind: input, shape index: {}]
  %s6 = inlined_call_operand.vmem [shape: f32[1,1024], index: 6, kind: input, shape index: {}]
  %s7 = inlined_call_operand.hbm [shape: f32[2,1,1024], index: 7, kind: output, shape index: {}]
  %s8 = sld [smem:[#allocation0]]
  $region50: #{tpu_custom_call.1} parent=0
    _
  %s10 = ssub.s32 1, %s8
  %s11 = scalar_select 0, %s10, %s8
  $region1: #{tpu_custom_call.1} parent=0
    #allocation2 [shape = 'u8[16384]{0}', space=vmem, size = 0x4000, scoped, tag = 'input window, operand 3, single buffered']
    #allocation3 [shape = 's32[1]{0}', space=sflag, size = 0x4, scoped, tag = 'scoped memory for tpu_custom_call.1']
    #allocation4 [shape = 's32[1]{0}', space=sflag, size = 0x4, scoped, tag = 'scoped memory for tpu_custom_call.1']
    #allocation5 [shape = 'u8[262144]{0}', space=vmem, size = 0x40000, scoped, tag = 'input window, operand 5, single buffered']
    #allocation6 [shape = 's32[1]{0}', space=sflag, size = 0x4, scoped, tag = 'scoped memory for tpu_custom_call.1']
    #allocation7 [shape = 'u8[8192]{0}', space=vmem, size = 0x2000, scoped, tag = 'output window, operand 0, single buffered']
    %12 = vsyncpa [#allocation3], 0
    %13 = vsyncpa [#allocation6], 0
    %14 = vsyncpa [#allocation4], 0
    // Predicated region
    $region2: #{tpu_custom_call.1} parent=1 // pred_check
      _
    $region3: #{tpu_custom_call.1} parent=1 // pred_check_branch
      %16 = sbr.rel (0) target = $region5
    $region4: #{tpu_custom_call.1} parent=1 // pred_region
      _
    $region5: #{tpu_custom_call.1} parent=1 // pred_fallthru
      _
    // Predicated region
    $region6: #{tpu_custom_call.1} parent=1 // pred_check
      _
    $region7: #{tpu_custom_call.1} parent=1 // pred_check_branch
      %18 = sbr.rel (0) target = $region9
    $region8: #{tpu_custom_call.1} parent=1 // pred_region
      _
    $region9: #{tpu_custom_call.1} parent=1 // pred_fallthru
      _
    // Predicated region
    $region10: #{tpu_custom_call.1} parent=1 // pred_check
      _
    $region11: #{tpu_custom_call.1} parent=1 // pred_check_branch
      %20 = sbr.rel (0) target = $region13
    $region12: #{tpu_custom_call.1} parent=1 // pred_region
      _
    $region13: #{tpu_custom_call.1} parent=1 // pred_fallthru
      _
    // Predicated region
    $region14: #{tpu_custom_call.1} parent=1 // pred_check
      _
    $region15: #{tpu_custom_call.1} parent=1 // pred_check_branch
      %22 = sbr.rel (0) target = $region17
    $region16: #{tpu_custom_call.1} parent=1 // pred_region
      %s24 = ssub.s32 512, 512
      %25 = vsyncadd [#allocation3], %s24
      %s26 = sshll.u32 [#allocation2], 4
      %s27 = int_to_ptr.vmem [resolvable:$true] %s26
      %32 = dma.hbm_to_vmem [thread:$0]  %s3, 512, %s27, [#allocation3], 64, 64, 4
    $region17: #{tpu_custom_call.1} parent=1 // pred_fallthru
      _
    // Predicated region
    $region18: #{tpu_custom_call.1} parent=1 // pred_check
      _
    $region19: #{tpu_custom_call.1} parent=1 // pred_check_branch
      %34 = sbr.rel (0) target = $region21
    $region20: #{tpu_custom_call.1} parent=1 // pred_region
      _
    $region21: #{tpu_custom_call.1} parent=1 // pred_fallthru
      _
    // Predicated region
    $region22: #{tpu_custom_call.1} parent=1 // pred_check
      _
    $region23: #{tpu_custom_call.1} parent=1 // pred_check_branch
      %36 = sbr.rel (0) target = $region25
    $region24: #{tpu_custom_call.1} parent=1 // pred_region
      %s38 = ssub.s32 8192, 8192
      %39 = vsyncadd [#allocation6], %s38
      %s40 = sshll.u32 [#allocation5], 4
      %s41 = int_to_ptr.vmem [resolvable:$true] %s40
      %46 = dma.hbm_to_vmem [thread:$0]  %s5, 8192, %s41, [#allocation6], 512, 512, 32
    $region25: #{tpu_custom_call.1} parent=1 // pred_fallthru
      _
    // Predicated region
    $region26: #{tpu_custom_call.1} parent=1 // pred_check
      _
    $region27: #{tpu_custom_call.1} parent=1 // pred_check_branch
      %48 = sbr.rel (0) target = $region29
    $region28: #{tpu_custom_call.1} parent=1 // pred_region
      _
    $region29: #{tpu_custom_call.1} parent=1 // pred_fallthru
      _
    // Predicated region
    $region30: #{tpu_custom_call.1} parent=1 // pred_check
      _
    $region31: #{tpu_custom_call.1} parent=1 // pred_check_branch
      %50 = sbr.rel (0) target = $region33
    $region32: #{tpu_custom_call.1} parent=1 // pred_region
      %51 = dma.done [#allocation3], 512
    $region33: #{tpu_custom_call.1} parent=1 // pred_fallthru
      _
    // Predicated region
    $region34: #{tpu_custom_call.1} parent=1 // pred_check
      _
    $region35: #{tpu_custom_call.1} parent=1 // pred_check_branch
      %53 = sbr.rel (0) target = $region37
    $region36: #{tpu_custom_call.1} parent=1 // pred_region
      %54 = dma.done [#allocation6], 8192
    $region37: #{tpu_custom_call.1} parent=1 // pred_fallthru
      _
    %p56 = scmp.eq.s32.totalorder 0, 0
    // Predicated region
    $region38: #{tpu_custom_call.1} parent=1 // pred_check
      %p57 = pneg %p56
    $region39: #{tpu_custom_call.1} parent=1 // pred_check_branch
      %59 = sbr.rel (%p57) target = $region41
    $region40: #{tpu_custom_call.1} parent=1 // pred_region
      %60 = vst [vmem:[#allocation7] sm:$0xff] -inf
      %61 = vst [vmem:[#allocation7 + $0x8] sm:$0xff] -inf
    $region41: #{tpu_custom_call.1} parent=1 // pred_fallthru
      _
    %v62 = vld [vmem:[%s0] sm:$0xf]
    %v63 = vld [vmem:[%s0 + $0x4] sm:$0xf]
    %v64 = vld [vmem:[%s0 + $0x8] sm:$0xf]
    %v65 = vld [vmem:[%s0 + $0xc] sm:$0xf]
    %v66 = vld [vmem:[%s1] sm:$0x3]
    %v67 = vld [vmem:[%s2] sm:$0x1]
    %v69 = vlaneseq
    %v70 = vshrl.u32 %v69, 7
    %v71 = vsub.s32 0, %v70
    %v72 = vrot.slane %v67, %v71
    %v78 = vunpack.c.l.b16 %v62
    %v79 = vunpack.c.l.b16 %v63
    %v80 = vunpack.c.l.b16 %v64
    %v81 = vunpack.c.l.b16 %v65
    %v82 = vpack.c.b16 %v79, %v78
    %v83 = vpack.c.b16 %v81, %v80
    %vm84 = vcmask 23552
    %v86 = vsel %vm84, %v82, 0
    %v89 = vsel %vm84, %v83, 0
    %vm91 = vcmask 1040384
    %vm92 = vcmask 1041408
    %v93 = vsel %vm91, 4294967295, 65535
    %v94 = vsel %vm92, %v93, 0
    %v96 = vand.u32 %v66, %v94
    %98 = vmatprep.subr.bf16.mxu0 0
    %99 = vmatpush1.bf16.msra.mxu0 0
    %100 = vmatprep.subr.bf16.mxu0 0
    %101 = vmatpush1.bf16.msra.mxu0 0
    %102 = vmatprep.subr.bf16.mxu0 0
    %103 = vmatpush1.bf16.msra.mxu0 0
    %104 = vmatprep.subr.bf16.mxu0 0
    %105 = vmatpush1.bf16.msra.mxu0 0
    %106 = vmatprep.subr.bf16.mxu0 0
    %107 = vmatpush1.bf16.msra.mxu0 0
    %108 = vmatprep.subr.bf16.mxu0 0
    %109 = vmatpush1.bf16.msra.mxu0 0
    %110 = vmatprep.subr.bf16.mxu0 0
    %111 = vmatpush1.bf16.msra.mxu0 0
    %112 = vmatprep.subr.bf16.mxu0 0
    %113 = vmatpush1.bf16.msra.mxu0 %v96
    %114 = vmatprep.subr.bf16.mxu0 0
    %115 = vmatpush2.bf16.msra.mxu0 0
    %116 = vmatprep.subr.bf16.mxu0 0
    %117 = vmatpush2.bf16.msra.mxu0 0
    %118 = vmatprep.subr.bf16.mxu0 0
    %119 = vmatpush2.bf16.msra.mxu0 0
    %120 = vmatprep.subr.bf16.mxu0 0
    %121 = vmatpush2.bf16.msra.mxu0 0
    %122 = vmatprep.subr.bf16.mxu0 0
    %123 = vmatpush2.bf16.msra.mxu0 0
    %124 = vmatprep.subr.bf16.mxu0 0
    %125 = vmatpush2.bf16.msra.mxu0 0
    %126 = vmatprep.subr.bf16.mxu0 0
    %127 = vmatpush2.bf16.msra.mxu0 0
    %128 = vmatprep.subr.bf16.mxu0 0
    %129 = vmatpush2.bf16.msra.mxu0 0
    %130 = vmatprep.mubr.bf16.mxu0 0
    %131 = vmatmul.mubr.bf16.gmra.mxu0 %v86
    %v132 = vpop.f32.mrf.mxu0
    %v133 = vadd.f32 %v72, %v132
    %v134 = vpop.f32.mrf.mxu0
    %v135 = vpop.f32.mrf.mxu0
    %v136 = vadd.f32 %v72, %v135
    %v137 = vpop.f32.mrf.mxu0
    %138 = vmatprep.mubr.bf16.mxu0 0
    %139 = vmatmul.mubr.bf16.gmra.mxu0 %v89
    %v140 = vpop.f32.mrf.mxu0
    %v141 = vadd.f32 %v72, %v140
    %v142 = vpop.f32.mrf.mxu0
    %v143 = vpop.f32.mrf.mxu0
    %v144 = vadd.f32 %v72, %v143
    %v145 = vpop.f32.mrf.mxu0
    %146 = vdwg.mxu0
    %v147 = vmax.f32 %v133, 0.0
    %v148 = vmax.f32 %v136, 0.0
    %v149 = vmax.f32 %v141, 0.0
    %v150 = vmax.f32 %v144, 0.0
    %v151 = vpack.c.bf16 %v148, %v147
    %v152 = vpack.c.bf16 %v150, %v149
    %v153 = vld [vmem:[#allocation2] sm:$0xf]
    %v154 = vld [vmem:[#allocation2 + $0x4] sm:$0xf]
    %v155 = vld [vmem:[#allocation2 + $0x8] sm:$0xf]
    %v156 = vld [vmem:[#allocation2 + $0xc] sm:$0xf]
    %v157 = vld [vmem:[#allocation2 + $0x10] sm:$0xf]
    %v158 = vld [vmem:[#allocation2 + $0x14] sm:$0xf]
    %v159 = vld [vmem:[#allocation2 + $0x18] sm:$0xf]
    %v160 = vld [vmem:[#allocation2 + $0x1c] sm:$0xf]
    %v161 = vld [vmem:[%s4] sm:$0x1]
    %v163 = vlaneseq
    %v164 = vshrl.u32 %v163, 7
    %v165 = vsub.s32 0, %v164
    %v166 = vrot.slane %v161, %v165
    %v176 = vunpack.c.l.b16 %v153
    %v177 = vunpack.c.l.b16 %v154
    %v178 = vunpack.c.l.b16 %v155
    %v179 = vunpack.c.l.b16 %v156
    %v180 = vunpack.c.l.b16 %v157
    %v181 = vunpack.c.l.b16 %v158
    %v182 = vunpack.c.l.b16 %v159
    %v183 = vunpack.c.l.b16 %v160
    %v184 = vpack.c.b16 %v177, %v176
    %v185 = vpack.c.b16 %v179, %v178
    %v186 = vpack.c.b16 %v181, %v180
    %v187 = vpack.c.b16 %v183, %v182
    %vm192 = vcmask 523264
    %v194 = vsel %vm192, %v151, 0
    %v197 = vsel %vm192, %v152, 0
    %199 = vmatprep.subr.bf16.mxu0 0
    %200 = vmatpush1.bf16.msra.mxu0 0
    %201 = vmatprep.subr.bf16.mxu0 0
    %202 = vmatpush1.bf16.msra.mxu0 0
    %203 = vmatprep.subr.bf16.mxu0 0
    %204 = vmatpush1.bf16.msra.mxu0 0
    %205 = vmatprep.subr.bf16.mxu0 0
    %206 = vmatpush1.bf16.msra.mxu0 0
    %207 = vmatprep.subr.bf16.mxu0 0
    %208 = vmatpush1.bf16.msra.mxu0 %v187
    %209 = vmatprep.subr.bf16.mxu0 0
    %210 = vmatpush1.bf16.msra.mxu0 %v186
    %211 = vmatprep.subr.bf16.mxu0 0
    %212 = vmatpush1.bf16.msra.mxu0 %v185
    %213 = vmatprep.subr.bf16.mxu0 0
    %214 = vmatpush1.bf16.msra.mxu0 %v184
    %215 = vmatprep.subr.bf16.mxu0 0
    %216 = vmatpush2.bf16.msra.mxu0 0
    %217 = vmatprep.subr.bf16.mxu0 0
    %218 = vmatpush2.bf16.msra.mxu0 0
    %219 = vmatprep.subr.bf16.mxu0 0
    %220 = vmatpush2.bf16.msra.mxu0 0
    %221 = vmatprep.subr.bf16.mxu0 0
    %222 = vmatpush2.bf16.msra.mxu0 0
    %223 = vmatprep.subr.bf16.mxu0 0
    %224 = vmatpush2.bf16.msra.mxu0 0
    %225 = vmatprep.subr.bf16.mxu0 0
    %226 = vmatpush2.bf16.msra.mxu0 0
    %227 = vmatprep.subr.bf16.mxu0 0
    %228 = vmatpush2.bf16.msra.mxu0 0
    %229 = vmatprep.subr.bf16.mxu0 0
    %230 = vmatpush2.bf16.msra.mxu0 0
    %231 = vmatprep.mubr.bf16.mxu0 0
    %232 = vmatmul.mubr.bf16.gmra.mxu0 %v194
    %v233 = vpop.f32.mrf.mxu0
    %v234 = vadd.f32 %v166, %v233
    %v235 = vpop.f32.mrf.mxu0
    %v236 = vpop.f32.mrf.mxu0
    %v237 = vadd.f32 %v166, %v236
    %v238 = vpop.f32.mrf.mxu0
    %239 = vmatprep.mubr.bf16.mxu0 0
    %240 = vmatmul.mubr.bf16.gmra.mxu0 %v197
    %v241 = vpop.f32.mrf.mxu0
    %v242 = vadd.f32 %v166, %v241
    %v243 = vpop.f32.mrf.mxu0
    %v244 = vpop.f32.mrf.mxu0
    %v245 = vadd.f32 %v166, %v244
    %v246 = vpop.f32.mrf.mxu0
    %247 = vdwg.mxu0
    %v248 = vmax.f32 %v234, 0.0
    %v249 = vmax.f32 %v237, 0.0
    %v250 = vmax.f32 %v242, 0.0
    %v251 = vmax.f32 %v245, 0.0
    %v252 = vpack.c.bf16 %v249, %v248
    %v253 = vpack.c.bf16 %v251, %v250
    %v254 = vld [vmem:[#allocation5] sm:$0xff]
    %v255 = vld [vmem:[#allocation5 + $0x8] sm:$0xff]
    %v256 = vld [vmem:[#allocation5 + $0x10] sm:$0xff]
    %v257 = vld [vmem:[#allocation5 + $0x18] sm:$0xff]
    %v258 = vld [vmem:[#allocation5 + $0x20] sm:$0xff]
    %v259 = vld [vmem:[#allocation5 + $0x28] sm:$0xff]
    %v260 = vld [vmem:[#allocation5 + $0x30] sm:$0xff]
    %v261 = vld [vmem:[#allocation5 + $0x38] sm:$0xff]
    %v262 = vld [vmem:[#allocation5 + $0x40] sm:$0xff]
    %v263 = vld [vmem:[#allocation5 + $0x48] sm:$0xff]
    %v264 = vld [vmem:[#allocation5 + $0x50] sm:$0xff]
    %v265 = vld [vmem:[#allocation5 + $0x58] sm:$0xff]
    %v266 = vld [vmem:[#allocation5 + $0x60] sm:$0xff]
    %v267 = vld [vmem:[#allocation5 + $0x68] sm:$0xff]
    %v268 = vld [vmem:[#allocation5 + $0x70] sm:$0xff]
    %v269 = vld [vmem:[#allocation5 + $0x78] sm:$0xff]
    %v270 = vld [vmem:[#allocation5 + $0x80] sm:$0xff]
    %v271 = vld [vmem:[#allocation5 + $0x88] sm:$0xff]
    %v272 = vld [vmem:[#allocation5 + $0x90] sm:$0xff]
    %v273 = vld [vmem:[#allocation5 + $0x98] sm:$0xff]
    %v274 = vld [vmem:[#allocation5 + $0xa0] sm:$0xff]
    %v275 = vld [vmem:[#allocation5 + $0xa8] sm:$0xff]
    %v276 = vld [vmem:[#allocation5 + $0xb0] sm:$0xff]
    %v277 = vld [vmem:[#allocation5 + $0xb8] sm:$0xff]
    %v278 = vld [vmem:[#allocation5 + $0xc0] sm:$0xff]
    %v279 = vld [vmem:[#allocation5 + $0xc8] sm:$0xff]
    %v280 = vld [vmem:[#allocation5 + $0xd0] sm:$0xff]
    %v281 = vld [vmem:[#allocation5 + $0xd8] sm:$0xff]
    %v282 = vld [vmem:[#allocation5 + $0xe0] sm:$0xff]
    %v283 = vld [vmem:[#allocation5 + $0xe8] sm:$0xff]
    %v284 = vld [vmem:[#allocation5 + $0xf0] sm:$0xff]
    %v285 = vld [vmem:[#allocation5 + $0xf8] sm:$0xff]
    %v286 = vld [vmem:[#allocation5 + $0x100] sm:$0xff]
    %v287 = vld [vmem:[#allocation5 + $0x108] sm:$0xff]
    %v288 = vld [vmem:[#allocation5 + $0x110] sm:$0xff]
    %v289 = vld [vmem:[#allocation5 + $0x118] sm:$0xff]
    %v290 = vld [vmem:[#allocation5 + $0x120] sm:$0xff]
    %v291 = vld [vmem:[#allocation5 + $0x128] sm:$0xff]
    %v292 = vld [vmem:[#allocation5 + $0x130] sm:$0xff]
    %v293 = vld [vmem:[#allocation5 + $0x138] sm:$0xff]
    %v294 = vld [vmem:[#allocation5 + $0x140] sm:$0xff]
    %v295 = vld [vmem:[#allocation5 + $0x148] sm:$0xff]
    %v296 = vld [vmem:[#allocation5 + $0x150] sm:$0xff]
    %v297 = vld [vmem:[#allocation5 + $0x158] sm:$0xff]
    %v298 = vld [vmem:[#allocation5 + $0x160] sm:$0xff]
    %v299 = vld [vmem:[#allocation5 + $0x168] sm:$0xff]
    %v300 = vld [vmem:[#allocation5 + $0x170] sm:$0xff]
    %v301 = vld [vmem:[#allocation5 + $0x178] sm:$0xff]
    %v302 = vld [vmem:[#allocation5 + $0x180] sm:$0xff]
    %v303 = vld [vmem:[#allocation5 + $0x188] sm:$0xff]
    %v304 = vld [vmem:[#allocation5 + $0x190] sm:$0xff]
    %v305 = vld [vmem:[#allocation5 + $0x198] sm:$0xff]
    %v306 = vld [vmem:[#allocation5 + $0x1a0] sm:$0xff]
    %v307 = vld [vmem:[#allocation5 + $0x1a8] sm:$0xff]
    %v308 = vld [vmem:[#allocation5 + $0x1b0] sm:$0xff]
    %v309 = vld [vmem:[#allocation5 + $0x1b8] sm:$0xff]
    %v310 = vld [vmem:[#allocation5 + $0x1c0] sm:$0xff]
    %v311 = vld [vmem:[#allocation5 + $0x1c8] sm:$0xff]
    %v312 = vld [vmem:[#allocation5 + $0x1d0] sm:$0xff]
    %v313 = vld [vmem:[#allocation5 + $0x1d8] sm:$0xff]
    %v314 = vld [vmem:[#allocation5 + $0x1e0] sm:$0xff]
    %v315 = vld [vmem:[#allocation5 + $0x1e8] sm:$0xff]
    %v316 = vld [vmem:[#allocation5 + $0x1f0] sm:$0xff]
    %v317 = vld [vmem:[#allocation5 + $0x1f8] sm:$0xff]
    %v318 = vld [vmem:[%s6] sm:$0xff]
    %v320 = vlaneseq
    %v321 = vshrl.u32 %v320, 7
    %v322 = vsub.s32 0, %v321
    %v323 = vrot.slane %v318, %v322
    %v324 = vlaneseq
    %v325 = vshrl.u32 %v324, 7
    %v326 = vsub.s32 1, %v325
    %v327 = vrot.slane %v318, %v326
    %v328 = vlaneseq
    %v329 = vshrl.u32 %v328, 7
    %v330 = vsub.s32 2, %v329
    %v331 = vrot.slane %v318, %v330
    %v332 = vlaneseq
    %v333 = vshrl.u32 %v332, 7
    %v334 = vsub.s32 3, %v333
    %v335 = vrot.slane %v318, %v334
    %v336 = vlaneseq
    %v337 = vshrl.u32 %v336, 7
    %v338 = vsub.s32 4, %v337
    %v339 = vrot.slane %v318, %v338
    %v340 = vlaneseq
    %v341 = vshrl.u32 %v340, 7
    %v342 = vsub.s32 5, %v341
    %v343 = vrot.slane %v318, %v342
    %v344 = vlaneseq
    %v345 = vshrl.u32 %v344, 7
    %v346 = vsub.s32 6, %v345
    %v347 = vrot.slane %v318, %v346
    %v348 = vlaneseq
    %v349 = vshrl.u32 %v348, 7
    %v350 = vsub.s32 7, %v349
    %v351 = vrot.slane %v318, %v350
    %v424 = vunpack.c.l.b16 %v254
    %v425 = vunpack.c.h.b16 %v254
    %v426 = vunpack.c.l.b16 %v255
    %v427 = vunpack.c.h.b16 %v255
    %v428 = vunpack.c.l.b16 %v256
    %v429 = vunpack.c.h.b16 %v256
    %v430 = vunpack.c.l.b16 %v257
    %v431 = vunpack.c.h.b16 %v257
    %v432 = vunpack.c.l.b16 %v258
    %v433 = vunpack.c.h.b16 %v258
    %v434 = vunpack.c.l.b16 %v259
    %v435 = vunpack.c.h.b16 %v259
    %v436 = vunpack.c.l.b16 %v260
    %v437 = vunpack.c.h.b16 %v260
    %v438 = vunpack.c.l.b16 %v261
    %v439 = vunpack.c.h.b16 %v261
    %v440 = vunpack.c.l.b16 %v262
    %v441 = vunpack.c.h.b16 %v262
    %v442 = vunpack.c.l.b16 %v263
    %v443 = vunpack.c.h.b16 %v263
    %v444 = vunpack.c.l.b16 %v264
    %v445 = vunpack.c.h.b16 %v264
    %v446 = vunpack.c.l.b16 %v265
    %v447 = vunpack.c.h.b16 %v265
    %v448 = vunpack.c.l.b16 %v266
    %v449 = vunpack.c.h.b16 %v266
    %v450 = vunpack.c.l.b16 %v267
    %v451 = vunpack.c.h.b16 %v267
    %v452 = vunpack.c.l.b16 %v268
    %v453 = vunpack.c.h.b16 %v268
    %v454 = vunpack.c.l.b16 %v269
    %v455 = vunpack.c.h.b16 %v269
    %v456 = vunpack.c.l.b16 %v270
    %v457 = vunpack.c.h.b16 %v270
    %v458 = vunpack.c.l.b16 %v271
    %v459 = vunpack.c.h.b16 %v271
    %v460 = vunpack.c.l.b16 %v272
    %v461 = vunpack.c.h.b16 %v272
    %v462 = vunpack.c.l.b16 %v273
    %v463 = vunpack.c.h.b16 %v273
    %v464 = vunpack.c.l.b16 %v274
    %v465 = vunpack.c.h.b16 %v274
    %v466 = vunpack.c.l.b16 %v275
    %v467 = vunpack.c.h.b16 %v275
    %v468 = vunpack.c.l.b16 %v276
    %v469 = vunpack.c.h.b16 %v276
    %v470 = vunpack.c.l.b16 %v277
    %v471 = vunpack.c.h.b16 %v277
    %v472 = vunpack.c.l.b16 %v278
    %v473 = vunpack.c.h.b16 %v278
    %v474 = vunpack.c.l.b16 %v279
    %v475 = vunpack.c.h.b16 %v279
    %v476 = vunpack.c.l.b16 %v280
    %v477 = vunpack.c.h.b16 %v280
    %v478 = vunpack.c.l.b16 %v281
    %v479 = vunpack.c.h.b16 %v281
    %v480 = vunpack.c.l.b16 %v282
    %v481 = vunpack.c.h.b16 %v282
    %v482 = vunpack.c.l.b16 %v283
    %v483 = vunpack.c.h.b16 %v283
    %v484 = vunpack.c.l.b16 %v284
    %v485 = vunpack.c.h.b16 %v284
    %v486 = vunpack.c.l.b16 %v285
    %v487 = vunpack.c.h.b16 %v285
    %v488 = vunpack.c.l.b16 %v286
    %v489 = vunpack.c.h.b16 %v286
    %v490 = vunpack.c.l.b16 %v287
    %v491 = vunpack.c.h.b16 %v287
    %v492 = vunpack.c.l.b16 %v288
    %v493 = vunpack.c.h.b16 %v288
    %v494 = vunpack.c.l.b16 %v289
    %v495 = vunpack.c.h.b16 %v289
    %v496 = vunpack.c.l.b16 %v290
    %v497 = vunpack.c.h.b16 %v290
    %v498 = vunpack.c.l.b16 %v291
    %v499 = vunpack.c.h.b16 %v291
    %v500 = vunpack.c.l.b16 %v292
    %v501 = vunpack.c.h.b16 %v292
    %v502 = vunpack.c.l.b16 %v293
    %v503 = vunpack.c.h.b16 %v293
    %v504 = vunpack.c.l.b16 %v294
    %v505 = vunpack.c.h.b16 %v294
    %v506 = vunpack.c.l.b16 %v295
    %v507 = vunpack.c.h.b16 %v295
    %v508 = vunpack.c.l.b16 %v296
    %v509 = vunpack.c.h.b16 %v296
    %v510 = vunpack.c.l.b16 %v297
    %v511 = vunpack.c.h.b16 %v297
    %v512 = vunpack.c.l.b16 %v298
    %v513 = vunpack.c.h.b16 %v298
    %v514 = vunpack.c.l.b16 %v299
    %v515 = vunpack.c.h.b16 %v299
    %v516 = vunpack.c.l.b16 %v300
    %v517 = vunpack.c.h.b16 %v300
    %v518 = vunpack.c.l.b16 %v301
    %v519 = vunpack.c.h.b16 %v301
    %v520 = vunpack.c.l.b16 %v302
    %v521 = vunpack.c.h.b16 %v302
    %v522 = vunpack.c.l.b16 %v303
    %v523 = vunpack.c.h.b16 %v303
    %v524 = vunpack.c.l.b16 %v304
    %v525 = vunpack.c.h.b16 %v304
    %v526 = vunpack.c.l.b16 %v305
    %v527 = vunpack.c.h.b16 %v305
    %v528 = vunpack.c.l.b16 %v306
    %v529 = vunpack.c.h.b16 %v306
    %v530 = vunpack.c.l.b16 %v307
    %v531 = vunpack.c.h.b16 %v307
    %v532 = vunpack.c.l.b16 %v308
    %v533 = vunpack.c.h.b16 %v308
    %v534 = vunpack.c.l.b16 %v309
    %v535 = vunpack.c.h.b16 %v309
    %v536 = vunpack.c.l.b16 %v310
    %v537 = vunpack.c.h.b16 %v310
    %v538 = vunpack.c.l.b16 %v311
    %v539 = vunpack.c.h.b16 %v311
    %v540 = vunpack.c.l.b16 %v312
    %v541 = vunpack.c.h.b16 %v312
    %v542 = vunpack.c.l.b16 %v313
    %v543 = vunpack.c.h.b16 %v313
    %v544 = vunpack.c.l.b16 %v314
    %v545 = vunpack.c.h.b16 %v314
    %v546 = vunpack.c.l.b16 %v315
    %v547 = vunpack.c.h.b16 %v315
    %v548 = vunpack.c.l.b16 %v316
    %v549 = vunpack.c.h.b16 %v316
    %v550 = vunpack.c.l.b16 %v317
    %v551 = vunpack.c.h.b16 %v317
    %v552 = vpack.c.b16 %v432, %v424
    %v553 = vpack.c.b16 %v433, %v425
    %v554 = vpack.c.b16 %v434, %v426
    %v555 = vpack.c.b16 %v435, %v427
    %v556 = vpack.c.b16 %v436, %v428
    %v557 = vpack.c.b16 %v437, %v429
    %v558 = vpack.c.b16 %v438, %v430
    %v559 = vpack.c.b16 %v439, %v431
    %v560 = vpack.c.b16 %v448, %v440
    %v561 = vpack.c.b16 %v449, %v441
    %v562 = vpack.c.b16 %v450, %v442
    %v563 = vpack.c.b16 %v451, %v443
    %v564 = vpack.c.b16 %v452, %v444
    %v565 = vpack.c.b16 %v453, %v445
    %v566 = vpack.c.b16 %v454, %v446
    %v567 = vpack.c.b16 %v455, %v447
    %v568 = vpack.c.b16 %v464, %v456
    %v569 = vpack.c.b16 %v465, %v457
    %v570 = vpack.c.b16 %v466, %v458
    %v571 = vpack.c.b16 %v467, %v459
    %v572 = vpack.c.b16 %v468, %v460
    %v573 = vpack.c.b16 %v469, %v461
    %v574 = vpack.c.b16 %v470, %v462
    %v575 = vpack.c.b16 %v471, %v463
    %v576 = vpack.c.b16 %v480, %v472
    %v577 = vpack.c.b16 %v481, %v473
    %v578 = vpack.c.b16 %v482, %v474
    %v579 = vpack.c.b16 %v483, %v475
    %v580 = vpack.c.b16 %v484, %v476
    %v581 = vpack.c.b16 %v485, %v477
    %v582 = vpack.c.b16 %v486, %v478
    %v583 = vpack.c.b16 %v487, %v479
    %v584 = vpack.c.b16 %v496, %v488
    %v585 = vpack.c.b16 %v497, %v489
    %v586 = vpack.c.b16 %v498, %v490
    %v587 = vpack.c.b16 %v499, %v491
    %v588 = vpack.c.b16 %v500, %v492
    %v589 = vpack.c.b16 %v501, %v493
    %v590 = vpack.c.b16 %v502, %v494
    %v591 = vpack.c.b16 %v503, %v495
    %v592 = vpack.c.b16 %v512, %v504
    %v593 = vpack.c.b16 %v513, %v505
    %v594 = vpack.c.b16 %v514, %v506
    %v595 = vpack.c.b16 %v515, %v507
    %v596 = vpack.c.b16 %v516, %v508
    %v597 = vpack.c.b16 %v517, %v509
    %v598 = vpack.c.b16 %v518, %v510
    %v599 = vpack.c.b16 %v519, %v511
    %v600 = vpack.c.b16 %v528, %v520
    %v601 = vpack.c.b16 %v529, %v521
    %v602 = vpack.c.b16 %v530, %v522
    %v603 = vpack.c.b16 %v531, %v523
    %v604 = vpack.c.b16 %v532, %v524
    %v605 = vpack.c.b16 %v533, %v525
    %v606 = vpack.c.b16 %v534, %v526
    %v607 = vpack.c.b16 %v535, %v527
    %v608 = vpack.c.b16 %v544, %v536
    %v609 = vpack.c.b16 %v545, %v537
    %v610 = vpack.c.b16 %v546, %v538
    %v611 = vpack.c.b16 %v547, %v539
    %v612 = vpack.c.b16 %v548, %v540
    %v613 = vpack.c.b16 %v549, %v541
    %v614 = vpack.c.b16 %v550, %v542
    %v615 = vpack.c.b16 %v551, %v543
    %680 = vmatprep.subr.bf16.mxu0 %v609
    %681 = vmatpush1.bf16.msra.mxu0 %v608
    %682 = vmatprep.subr.bf16.mxu0 %v601
    %683 = vmatpush1.bf16.msra.mxu0 %v600
    %684 = vmatprep.subr.bf16.mxu0 %v593
    %685 = vmatpush1.bf16.msra.mxu0 %v592
    %686 = vmatprep.subr.bf16.mxu0 %v585
    %687 = vmatpush1.bf16.msra.mxu0 %v584
    %688 = vmatprep.subr.bf16.mxu0 %v577
    %689 = vmatpush1.bf16.msra.mxu0 %v576
    %690 = vmatprep.subr.bf16.mxu0 %v569
    %691 = vmatpush1.bf16.msra.mxu0 %v568
    %692 = vmatprep.subr.bf16.mxu0 %v561
    %693 = vmatpush1.bf16.msra.mxu0 %v560
    %694 = vmatprep.subr.bf16.mxu0 %v553
    %695 = vmatpush1.bf16.msra.mxu0 %v552
    %696 = vmatprep.subr.bf16.mxu0 0
    %697 = vmatpush2.bf16.msra.mxu0 0
    %698 = vmatprep.subr.bf16.mxu0 0
    %699 = vmatpush2.bf16.msra.mxu0 0
    %700 = vmatprep.subr.bf16.mxu0 0
    %701 = vmatpush2.bf16.msra.mxu0 0
    %702 = vmatprep.subr.bf16.mxu0 0
    %703 = vmatpush2.bf16.msra.mxu0 0
    %704 = vmatprep.subr.bf16.mxu0 0
    %705 = vmatpush2.bf16.msra.mxu0 0
    %706 = vmatprep.subr.bf16.mxu0 0
    %707 = vmatpush2.bf16.msra.mxu0 0
    %708 = vmatprep.subr.bf16.mxu0 0
    %709 = vmatpush2.bf16.msra.mxu0 0
    %710 = vmatprep.subr.bf16.mxu0 0
    %711 = vmatpush2.bf16.msra.mxu0 0
    %712 = vmatprep.mubr.bf16.mxu0 0
    %713 = vmatmul.mubr.bf16.gmra.mxu0 %v252
    %v714 = vpop.f32.mrf.mxu0
    %v715 = vadd.f32 %v323, %v714
    %v716 = vpop.f32.mrf.mxu0
    %v717 = vadd.f32 %v327, %v716
    %v718 = vpop.f32.mrf.mxu0
    %v719 = vadd.f32 %v323, %v718
    %v720 = vpop.f32.mrf.mxu0
    %v721 = vadd.f32 %v327, %v720
    %722 = vmatprep.mubr.bf16.mxu0 0
    %723 = vmatmul.mubr.bf16.gmra.mxu0 %v253
    %v724 = vpop.f32.mrf.mxu0
    %v725 = vadd.f32 %v323, %v724
    %v726 = vpop.f32.mrf.mxu0
    %v727 = vadd.f32 %v327, %v726
    %v728 = vpop.f32.mrf.mxu0
    %v729 = vadd.f32 %v323, %v728
    %v730 = vpop.f32.mrf.mxu0
    %v731 = vadd.f32 %v327, %v730
    %732 = vdwg.mxu0
    %733 = vmatprep.subr.bf16.mxu0 %v611
    %734 = vmatpush1.bf16.msra.mxu0 %v610
    %735 = vmatprep.subr.bf16.mxu0 %v603
    %736 = vmatpush1.bf16.msra.mxu0 %v602
    %737 = vmatprep.subr.bf16.mxu0 %v595
    %738 = vmatpush1.bf16.msra.mxu0 %v594
    %739 = vmatprep.subr.bf16.mxu0 %v587
    %740 = vmatpush1.bf16.msra.mxu0 %v586
    %741 = vmatprep.subr.bf16.mxu0 %v579
    %742 = vmatpush1.bf16.msra.mxu0 %v578
    %743 = vmatprep.subr.bf16.mxu0 %v571
    %744 = vmatpush1.bf16.msra.mxu0 %v570
    %745 = vmatprep.subr.bf16.mxu0 %v563
    %746 = vmatpush1.bf16.msra.mxu0 %v562
    %747 = vmatprep.subr.bf16.mxu0 %v555
    %748 = vmatpush1.bf16.msra.mxu0 %v554
    %749 = vmatprep.subr.bf16.mxu0 0
    %750 = vmatpush2.bf16.msra.mxu0 0
    %751 = vmatprep.subr.bf16.mxu0 0
    %752 = vmatpush2.bf16.msra.mxu0 0
    %753 = vmatprep.subr.bf16.mxu0 0
    %754 = vmatpush2.bf16.msra.mxu0 0
    %755 = vmatprep.subr.bf16.mxu0 0
    %756 = vmatpush2.bf16.msra.mxu0 0
    %757 = vmatprep.subr.bf16.mxu0 0
    %758 = vmatpush2.bf16.msra.mxu0 0
    %759 = vmatprep.subr.bf16.mxu0 0
    %760 = vmatpush2.bf16.msra.mxu0 0
    %761 = vmatprep.subr.bf16.mxu0 0
    %762 = vmatpush2.bf16.msra.mxu0 0
    %763 = vmatprep.subr.bf16.mxu0 0
    %764 = vmatpush2.bf16.msra.mxu0 0
    %765 = vmatprep.mubr.bf16.mxu0 0
    %766 = vmatmul.mubr.bf16.gmra.mxu0 %v252
    %v767 = vpop.f32.mrf.mxu0
    %v768 = vadd.f32 %v331, %v767
    %v769 = vpop.f32.mrf.mxu0
    %v770 = vadd.f32 %v335, %v769
    %v771 = vpop.f32.mrf.mxu0
    %v772 = vadd.f32 %v331, %v771
    %v773 = vpop.f32.mrf.mxu0
    %v774 = vadd.f32 %v335, %v773
    %775 = vmatprep.mubr.bf16.mxu0 0
    %776 = vmatmul.mubr.bf16.gmra.mxu0 %v253
    %v777 = vpop.f32.mrf.mxu0
    %v778 = vadd.f32 %v331, %v777
    %v779 = vpop.f32.mrf.mxu0
    %v780 = vadd.f32 %v335, %v779
    %v781 = vpop.f32.mrf.mxu0
    %v782 = vadd.f32 %v331, %v781
    %v783 = vpop.f32.mrf.mxu0
    %v784 = vadd.f32 %v335, %v783
    %785 = vdwg.mxu0
    %786 = vmatprep.subr.bf16.mxu0 %v613
    %787 = vmatpush1.bf16.msra.mxu0 %v612
    %788 = vmatprep.subr.bf16.mxu0 %v605
    %789 = vmatpush1.bf16.msra.mxu0 %v604
    %790 = vmatprep.subr.bf16.mxu0 %v597
    %791 = vmatpush1.bf16.msra.mxu0 %v596
    %792 = vmatprep.subr.bf16.mxu0 %v589
    %793 = vmatpush1.bf16.msra.mxu0 %v588
    %794 = vmatprep.subr.bf16.mxu0 %v581
    %795 = vmatpush1.bf16.msra.mxu0 %v580
    %796 = vmatprep.subr.bf16.mxu0 %v573
    %797 = vmatpush1.bf16.msra.mxu0 %v572
    %798 = vmatprep.subr.bf16.mxu0 %v565
    %799 = vmatpush1.bf16.msra.mxu0 %v564
    %800 = vmatprep.subr.bf16.mxu0 %v557
    %801 = vmatpush1.bf16.msra.mxu0 %v556
    %802 = vmatprep.subr.bf16.mxu0 0
    %803 = vmatpush2.bf16.msra.mxu0 0
    %804 = vmatprep.subr.bf16.mxu0 0
    %805 = vmatpush2.bf16.msra.mxu0 0
    %806 = vmatprep.subr.bf16.mxu0 0
    %807 = vmatpush2.bf16.msra.mxu0 0
    %808 = vmatprep.subr.bf16.mxu0 0
    %809 = vmatpush2.bf16.msra.mxu0 0
    %810 = vmatprep.subr.bf16.mxu0 0
    %811 = vmatpush2.bf16.msra.mxu0 0
    %812 = vmatprep.subr.bf16.mxu0 0
    %813 = vmatpush2.bf16.msra.mxu0 0
    %814 = vmatprep.subr.bf16.mxu0 0
    %815 = vmatpush2.bf16.msra.mxu0 0
    %816 = vmatprep.subr.bf16.mxu0 0
    %817 = vmatpush2.bf16.msra.mxu0 0
    %818 = vmatprep.mubr.bf16.mxu0 0
    %819 = vmatmul.mubr.bf16.gmra.mxu0 %v252
    %v820 = vpop.f32.mrf.mxu0
    %v821 = vadd.f32 %v339, %v820
    %v822 = vpop.f32.mrf.mxu0
    %v823 = vadd.f32 %v343, %v822
    %v824 = vpop.f32.mrf.mxu0
    %v825 = vadd.f32 %v339, %v824
    %v826 = vpop.f32.mrf.mxu0
    %v827 = vadd.f32 %v343, %v826
    %828 = vmatprep.mubr.bf16.mxu0 0
    %829 = vmatmul.mubr.bf16.gmra.mxu0 %v253
    %v830 = vpop.f32.mrf.mxu0
    %v831 = vadd.f32 %v339, %v830
    %v832 = vpop.f32.mrf.mxu0
    %v833 = vadd.f32 %v343, %v832
    %v834 = vpop.f32.mrf.mxu0
    %v835 = vadd.f32 %v339, %v834
    %v836 = vpop.f32.mrf.mxu0
    %v837 = vadd.f32 %v343, %v836
    %838 = vdwg.mxu0
    %839 = vmatprep.subr.bf16.mxu0 %v615
    %840 = vmatpush1.bf16.msra.mxu0 %v614
    %841 = vmatprep.subr.bf16.mxu0 %v607
    %842 = vmatpush1.bf16.msra.mxu0 %v606
    %843 = vmatprep.subr.bf16.mxu0 %v599
    %844 = vmatpush1.bf16.msra.mxu0 %v598
    %845 = vmatprep.subr.bf16.mxu0 %v591
    %846 = vmatpush1.bf16.msra.mxu0 %v590
    %847 = vmatprep.subr.bf16.mxu0 %v583
    %848 = vmatpush1.bf16.msra.mxu0 %v582
    %849 = vmatprep.subr.bf16.mxu0 %v575
    %850 = vmatpush1.bf16.msra.mxu0 %v574
    %851 = vmatprep.subr.bf16.mxu0 %v567
    %852 = vmatpush1.bf16.msra.mxu0 %v566
    %853 = vmatprep.subr.bf16.mxu0 %v559
    %854 = vmatpush1.bf16.msra.mxu0 %v558
    %855 = vmatprep.subr.bf16.mxu0 0
    %856 = vmatpush2.bf16.msra.mxu0 0
    %857 = vmatprep.subr.bf16.mxu0 0
    %858 = vmatpush2.bf16.msra.mxu0 0
    %859 = vmatprep.subr.bf16.mxu0 0
    %860 = vmatpush2.bf16.msra.mxu0 0
    %861 = vmatprep.subr.bf16.mxu0 0
    %862 = vmatpush2.bf16.msra.mxu0 0
    %863 = vmatprep.subr.bf16.mxu0 0
    %864 = vmatpush2.bf16.msra.mxu0 0
    %865 = vmatprep.subr.bf16.mxu0 0
    %866 = vmatpush2.bf16.msra.mxu0 0
    %867 = vmatprep.subr.bf16.mxu0 0
    %868 = vmatpush2.bf16.msra.mxu0 0
    %869 = vmatprep.subr.bf16.mxu0 0
    %870 = vmatpush2.bf16.msra.mxu0 0
    %871 = vmatprep.mubr.bf16.mxu0 0
    %872 = vmatmul.mubr.bf16.gmra.mxu0 %v252
    %v873 = vpop.f32.mrf.mxu0
    %v874 = vadd.f32 %v347, %v873
    %v875 = vpop.f32.mrf.mxu0
    %v876 = vadd.f32 %v351, %v875
    %v877 = vpop.f32.mrf.mxu0
    %v878 = vadd.f32 %v347, %v877
    %v879 = vpop.f32.mrf.mxu0
    %v880 = vadd.f32 %v351, %v879
    %881 = vmatprep.mubr.bf16.mxu0 0
    %882 = vmatmul.mubr.bf16.gmra.mxu0 %v253
    %v883 = vpop.f32.mrf.mxu0
    %v884 = vadd.f32 %v347, %v883
    %v885 = vpop.f32.mrf.mxu0
    %v886 = vadd.f32 %v351, %v885
    %v887 = vpop.f32.mrf.mxu0
    %v888 = vadd.f32 %v347, %v887
    %v889 = vpop.f32.mrf.mxu0
    %v890 = vadd.f32 %v351, %v889
    %891 = vdwg.mxu0
    %v892 = vmax.f32 %v715, 0.0
    %v893 = vmax.f32 %v717, 0.0
    %v894 = vmax.f32 %v768, 0.0
    %v895 = vmax.f32 %v770, 0.0
    %v896 = vmax.f32 %v821, 0.0
    %v897 = vmax.f32 %v823, 0.0
    %v898 = vmax.f32 %v874, 0.0
    %v899 = vmax.f32 %v876, 0.0
    %v900 = vmax.f32 %v719, 0.0
    %v901 = vmax.f32 %v721, 0.0
    %v902 = vmax.f32 %v772, 0.0
    %v903 = vmax.f32 %v774, 0.0
    %v904 = vmax.f32 %v825, 0.0
    %v905 = vmax.f32 %v827, 0.0
    %v906 = vmax.f32 %v878, 0.0
    %v907 = vmax.f32 %v880, 0.0
    %v908 = vmax.f32 %v725, 0.0
    %v909 = vmax.f32 %v727, 0.0
    %v910 = vmax.f32 %v778, 0.0
    %v911 = vmax.f32 %v780, 0.0
    %v912 = vmax.f32 %v831, 0.0
    %v913 = vmax.f32 %v833, 0.0
    %v914 = vmax.f32 %v884, 0.0
    %v915 = vmax.f32 %v886, 0.0
    %v916 = vmax.f32 %v729, 0.0
    %v917 = vmax.f32 %v731, 0.0
    %v918 = vmax.f32 %v782, 0.0
    %v919 = vmax.f32 %v784, 0.0
    %v920 = vmax.f32 %v835, 0.0
    %v921 = vmax.f32 %v837, 0.0
    %v922 = vmax.f32 %v888, 0.0
    %v923 = vmax.f32 %v890, 0.0
    %v924 = vmax.f32 %v892, %v900
    %v925 = vrot.slane %v924, 4
    %v926 = vmax.f32 %v924, %v925
    %v927 = vrot.slane %v926, 2
    %v928 = vmax.f32 %v926, %v927
    %v929 = vrot.slane %v928, 1
    %v930 = vmax.f32 %v928, %v929
    %v931 = vmax.f32 %v893, %v901
    %v932 = vrot.slane %v931, 4
    %v933 = vmax.f32 %v931, %v932
    %v934 = vrot.slane %v933, 2
    %v935 = vmax.f32 %v933, %v934
    %v936 = vrot.slane %v935, 1
    %v937 = vmax.f32 %v935, %v936
    %v938 = vmax.f32 %v894, %v902
    %v939 = vrot.slane %v938, 4
    %v940 = vmax.f32 %v938, %v939
    %v941 = vrot.slane %v940, 2
    %v942 = vmax.f32 %v940, %v941
    %v943 = vrot.slane %v942, 1
    %v944 = vmax.f32 %v942, %v943
    %v945 = vmax.f32 %v895, %v903
    %v946 = vrot.slane %v945, 4
    %v947 = vmax.f32 %v945, %v946
    %v948 = vrot.slane %v947, 2
    %v949 = vmax.f32 %v947, %v948
    %v950 = vrot.slane %v949, 1
    %v951 = vmax.f32 %v949, %v950
    %v952 = vmax.f32 %v896, %v904
    %v953 = vrot.slane %v952, 4
    %v954 = vmax.f32 %v952, %v953
    %v955 = vrot.slane %v954, 2
    %v956 = vmax.f32 %v954, %v955
    %v957 = vrot.slane %v956, 1
    %v958 = vmax.f32 %v956, %v957
    %v959 = vmax.f32 %v897, %v905
    %v960 = vrot.slane %v959, 4
    %v961 = vmax.f32 %v959, %v960
    %v962 = vrot.slane %v961, 2
    %v963 = vmax.f32 %v961, %v962
    %v964 = vrot.slane %v963, 1
    %v965 = vmax.f32 %v963, %v964
    %v966 = vmax.f32 %v898, %v906
    %v967 = vrot.slane %v966, 4
    %v968 = vmax.f32 %v966, %v967
    %v969 = vrot.slane %v968, 2
    %v970 = vmax.f32 %v968, %v969
    %v971 = vrot.slane %v970, 1
    %v972 = vmax.f32 %v970, %v971
    %v973 = vmax.f32 %v899, %v907
    %v974 = vrot.slane %v973, 4
    %v975 = vmax.f32 %v973, %v974
    %v976 = vrot.slane %v975, 2
    %v977 = vmax.f32 %v975, %v976
    %v978 = vrot.slane %v977, 1
    %v979 = vmax.f32 %v977, %v978
    %v980 = vmax.f32 %v908, %v916
    %v981 = vrot.slane %v980, 4
    %v982 = vmax.f32 %v980, %v981
    %v983 = vrot.slane %v982, 2
    %v984 = vmax.f32 %v982, %v983
    %v985 = vrot.slane %v984, 1
    %v986 = vmax.f32 %v984, %v985
    %v987 = vmax.f32 %v909, %v917
    %v988 = vrot.slane %v987, 4
    %v989 = vmax.f32 %v987, %v988
    %v990 = vrot.slane %v989, 2
    %v991 = vmax.f32 %v989, %v990
    %v992 = vrot.slane %v991, 1
    %v993 = vmax.f32 %v991, %v992
    %v994 = vmax.f32 %v910, %v918
    %v995 = vrot.slane %v994, 4
    %v996 = vmax.f32 %v994, %v995
    %v997 = vrot.slane %v996, 2
    %v998 = vmax.f32 %v996, %v997
    %v999 = vrot.slane %v998, 1
    %v1000 = vmax.f32 %v998, %v999
    %v1001 = vmax.f32 %v911, %v919
    %v1002 = vrot.slane %v1001, 4
    %v1003 = vmax.f32 %v1001, %v1002
    %v1004 = vrot.slane %v1003, 2
    %v1005 = vmax.f32 %v1003, %v1004
    %v1006 = vrot.slane %v1005, 1
    %v1007 = vmax.f32 %v1005, %v1006
    %v1008 = vmax.f32 %v912, %v920
    %v1009 = vrot.slane %v1008, 4
    %v1010 = vmax.f32 %v1008, %v1009
    %v1011 = vrot.slane %v1010, 2
    %v1012 = vmax.f32 %v1010, %v1011
    %v1013 = vrot.slane %v1012, 1
    %v1014 = vmax.f32 %v1012, %v1013
    %v1015 = vmax.f32 %v913, %v921
    %v1016 = vrot.slane %v1015, 4
    %v1017 = vmax.f32 %v1015, %v1016
    %v1018 = vrot.slane %v1017, 2
    %v1019 = vmax.f32 %v1017, %v1018
    %v1020 = vrot.slane %v1019, 1
    %v1021 = vmax.f32 %v1019, %v1020
    %v1022 = vmax.f32 %v914, %v922
    %v1023 = vrot.slane %v1022, 4
    %v1024 = vmax.f32 %v1022, %v1023
    %v1025 = vrot.slane %v1024, 2
    %v1026 = vmax.f32 %v1024, %v1025
    %v1027 = vrot.slane %v1026, 1
    %v1028 = vmax.f32 %v1026, %v1027
    %v1029 = vmax.f32 %v915, %v923
    %v1030 = vrot.slane %v1029, 4
    %v1031 = vmax.f32 %v1029, %v1030
    %v1032 = vrot.slane %v1031, 2
    %v1033 = vmax.f32 %v1031, %v1032
    %v1034 = vrot.slane %v1033, 1
    %v1035 = vmax.f32 %v1033, %v1034
    %v1036 = vld [vmem:[#allocation7] sm:$0xff]
    %v1037 = vld [vmem:[#allocation7 + $0x8] sm:$0xff]
    %v1054 = vcombine.low %v930, %v937
    %v1055 = vcombine.low %v944, %v951
    %v1056 = vcombine.low %v958, %v965
    %v1057 = vcombine.low %v972, %v979
    %v1059 = vunpack.c.l.s4 1966171168
    %v1060 = vunpack.c.0.s8 %v1059
    %v1061 = vlaneseq
    %v1062 = vshrl.u32 %v1061, 7
    %v1063 = vsub.s32 %v1060, %v1062
    %v1064 = vrot.slane %v1054, %v1063
    %v1066 = vunpack.c.l.s4 1966171168
    %v1067 = vunpack.c.0.s8 %v1066
    %v1068 = vlaneseq
    %v1069 = vshrl.u32 %v1068, 7
    %v1070 = vsub.s32 %v1067, %v1069
    %v1071 = vrot.slane %v1055, %v1070
    %v1073 = vunpack.c.l.s4 1966171168
    %v1074 = vunpack.c.0.s8 %v1073
    %v1075 = vlaneseq
    %v1076 = vshrl.u32 %v1075, 7
    %v1077 = vsub.s32 %v1074, %v1076
    %v1078 = vrot.slane %v1056, %v1077
    %v1080 = vunpack.c.l.s4 1966171168
    %v1081 = vunpack.c.0.s8 %v1080
    %v1082 = vlaneseq
    %v1083 = vshrl.u32 %v1082, 7
    %v1084 = vsub.s32 %v1081, %v1083
    %v1085 = vrot.slane %v1057, %v1084
    %v1086 = vcombine.low %v1064, %v1071
    %v1087 = vcombine.low %v1078, %v1085
    %v1089 = vunpack.c.l.s4 1966171168
    %v1090 = vunpack.c.0.s8 %v1089
    %v1091 = vlaneseq
    %v1092 = vshrl.u32 %v1091, 7
    %v1093 = vsub.s32 %v1090, %v1092
    %v1094 = vrot.slane %v1086, %v1093
    %v1096 = vunpack.c.l.s4 1966171168
    %v1097 = vunpack.c.0.s8 %v1096
    %v1098 = vlaneseq
    %v1099 = vshrl.u32 %v1098, 7
    %v1100 = vsub.s32 %v1097, %v1099
    %v1101 = vrot.slane %v1087, %v1100
    %v1102 = vcombine.low %v1094, %v1101
    %v1103 = vcombine.low %v986, %v993
    %v1104 = vcombine.low %v1000, %v1007
    %v1105 = vcombine.low %v1014, %v1021
    %v1106 = vcombine.low %v1028, %v1035
    %v1108 = vunpack.c.l.s4 1966171168
    %v1109 = vunpack.c.0.s8 %v1108
    %v1110 = vlaneseq
    %v1111 = vshrl.u32 %v1110, 7
    %v1112 = vsub.s32 %v1109, %v1111
    %v1113 = vrot.slane %v1103, %v1112
    %v1115 = vunpack.c.l.s4 1966171168
    %v1116 = vunpack.c.0.s8 %v1115
    %v1117 = vlaneseq
    %v1118 = vshrl.u32 %v1117, 7
    %v1119 = vsub.s32 %v1116, %v1118
    %v1120 = vrot.slane %v1104, %v1119
    %v1122 = vunpack.c.l.s4 1966171168
    %v1123 = vunpack.c.0.s8 %v1122
    %v1124 = vlaneseq
    %v1125 = vshrl.u32 %v1124, 7
    %v1126 = vsub.s32 %v1123, %v1125
    %v1127 = vrot.slane %v1105, %v1126
    %v1129 = vunpack.c.l.s4 1966171168
    %v1130 = vunpack.c.0.s8 %v1129
    %v1131 = vlaneseq
    %v1132 = vshrl.u32 %v1131, 7
    %v1133 = vsub.s32 %v1130, %v1132
    %v1134 = vrot.slane %v1106, %v1133
    %v1135 = vcombine.low %v1113, %v1120
    %v1136 = vcombine.low %v1127, %v1134
    %v1138 = vunpack.c.l.s4 1966171168
    %v1139 = vunpack.c.0.s8 %v1138
    %v1140 = vlaneseq
    %v1141 = vshrl.u32 %v1140, 7
    %v1142 = vsub.s32 %v1139, %v1141
    %v1143 = vrot.slane %v1135, %v1142
    %v1145 = vunpack.c.l.s4 1966171168
    %v1146 = vunpack.c.0.s8 %v1145
    %v1147 = vlaneseq
    %v1148 = vshrl.u32 %v1147, 7
    %v1149 = vsub.s32 %v1146, %v1148
    %v1150 = vrot.slane %v1136, %v1149
    %v1151 = vcombine.low %v1143, %v1150
    %v1154 = vmax.f32 %v1036, %v1102
    %v1155 = vmax.f32 %v1037, %v1151
    %1156 = vst [vmem:[#allocation7] sm:$0xff] %v1154
    %1157 = vst [vmem:[#allocation7 + $0x8] sm:$0xff] %v1155
    // Predicated region
    $region42: #{tpu_custom_call.1} parent=1 // pred_check
      _
    $region43: #{tpu_custom_call.1} parent=1 // pred_check_branch
      %1159 = sbr.rel (0) target = $region45
    $region44: #{tpu_custom_call.1} parent=1 // pred_region
      %s1161 = ssub.s32 256, 256
      %1162 = vsyncadd [#allocation4], %s1161
      %s1163 = sshll.u32 [#allocation7], 4
      %s1164 = int_to_ptr.vmem [resolvable:$true] %s1163
      %1169 = dma.vmem_to_hbm [thread:$0]  %s1164, 256, %s7, [#allocation4], 128, 128, 8
    $region45: #{tpu_custom_call.1} parent=1 // pred_fallthru
      _
    // Predicated region
    $region46: #{tpu_custom_call.1} parent=1 // pred_check
      _
    $region47: #{tpu_custom_call.1} parent=1 // pred_check_branch
      %1171 = sbr.rel (0) target = $region49
    $region48: #{tpu_custom_call.1} parent=1 // pred_region
      %1172 = dma.done [#allocation4], 256
    $region49: #{tpu_custom_call.1} parent=1 // pred_fallthru
      _
    %1173 = vsyncpa [#allocation3], 1
    %1174 = vsyncpa [#allocation6], 1
    %1175 = vsyncpa [#allocation4], 1

</llo_original>
